<compile_context>
chip_gen: v7x
topology: tpu7x:2x2x1
jax: 0.10.0
libtpu: 0.0.40
codegen_flags: <defaults>
</compile_context>

<pallas_src>
import functools

import jax
import jax.numpy as jnp
from jax.experimental import pallas as pl
from jax.experimental.pallas import tpu as pltpu


def bag2vec_kernel(a_ref, e_ref, o_ref, acc_ref, *, tk, v_total, d,
                   e_resident, mask_v_tail, approx_recip):
    k = pl.program_id(1)

    @pl.when(k == 0)
    def _():
        acc_ref[...] = jnp.zeros_like(acc_ref)

    a = a_ref[...]
    if mask_v_tail:
        # Ragged vocab tail: columns >= V of the last tile hold stale VMEM
        # (possibly Inf/NaN) -- zero them so they cannot poison the matmul.
        # Cheap VPU select, only compiled in when V is not a multiple of tk.
        col = jax.lax.broadcasted_iota(jnp.int32, a.shape, 1)
        a = jnp.where(col < (v_total - k * tk), a, jnp.zeros_like(a))

    if e_resident:
        # Whole (V_pad, D+1) augmented table is VMEM-resident (fetched once by
        # the pipeline); slice out this step's rows.
        start = pl.multiple_of(k * tk, tk)
        e_tile = e_ref[pl.ds(start, tk), :]
    else:
        e_tile = e_ref[...]

    # Single MXU op per tile: the last column of E_aug carries the vocab
    # weights, so the accumulator's last column accumulates weighted row sums.
    acc_ref[...] += jnp.dot(a, e_tile, preferred_element_type=jnp.float32)

    @pl.when(k == pl.num_programs(1) - 1)
    def _():
        acc = acc_ref[...]
        rsum = acc[:, d:]                       # (tm, 1) weighted row sums
        inv = pl.reciprocal(jnp.maximum(jnp.float32(1e-15), rsum),
                            approx=approx_recip)
        o_ref[...] = (acc[:, :d] * inv).astype(o_ref.dtype)


def _round_up(x, m):
    return ((x + m - 1) // m) * m


def bag2vec_forward(A, weights, emb, *, tm=512, tk=1024,
                    compute_dtype=jnp.bfloat16,
                    e_resident_bytes=8 * 1024 * 1024,
                    vmem_limit_bytes=48 * 1024 * 1024):
    """A: (N, V) dense bag counts; weights: (V,); emb: (V, D) -> (N, D) float32.

    compute_dtype=bfloat16 halves A/E HBM traffic and roughly doubles MXU rate
    (exact for integer bag counts < 256; ~1e-3 relative error from E
    quantization).  Pass jnp.float32 for the exact path.
    """
    N, V = A.shape
    V2, D = emb.shape
    assert V2 == V, "embedding vocab dim must match A's column count"

    compute_dtype = jnp.dtype(compute_dtype)
    approx_recip = compute_dtype != jnp.dtype(jnp.float32)

    # Tile selection: shrink for small inputs; cap tm so the row-tile grid axis
    # has at least 2 steps (keeps both TensorCores busy on v7x megacore).
    tm = min(tm, _round_up(max(pl.cdiv(N, 2), 8), 8))
    tk = min(tk, _round_up(max(V, 128), 128))
    V_pad = _round_up(V, tk)

    # Fold the per-vocab weights into the embedding table and append the
    # weights as an extra column so the row sum falls out of the same matmul.
    w = weights.astype(jnp.float32).reshape(V, 1)
    e_aug = jnp.concatenate([w * emb.astype(jnp.float32), w], axis=-1)  # (V, D+1)
    if V_pad != V:
        # Cheap pad of the small table only; A itself is never padded.
        e_aug = jnp.pad(e_aug, ((0, V_pad - V), (0, 0)))
    d_aug = D + 1

    a_c = A.astype(compute_dtype)   # no-op if already compute_dtype; fuses under jit
    e_c = e_aug.astype(compute_dtype)

    # Keep E_aug VMEM-resident (constant block index -> fetched exactly once)
    # when it fits the budget; otherwise stream (tk, D+1) tiles per k step.
    # TODO(synk): pipeline_mode=pl.Buffered(1) on the resident spec would halve
    # its VMEM footprint; kept on the default double buffer for compatibility.
    e_resident = V_pad * d_aug * e_c.dtype.itemsize <= e_resident_bytes
    if e_resident:
        e_spec = pl.BlockSpec((V_pad, d_aug), lambda i, k: (0, 0))
    else:
        e_spec = pl.BlockSpec((tk, d_aug), lambda i, k: (k, 0))

    grid = (pl.cdiv(N, tm), V_pad // tk)
    kernel = functools.partial(
        bag2vec_kernel, tk=tk, v_total=V, d=D, e_resident=e_resident,
        mask_v_tail=(V % tk != 0), approx_recip=approx_recip)

    return pl.pallas_call(
        kernel,
        out_shape=jax.ShapeDtypeStruct((N, D), jnp.float32),
        grid_spec=pltpu.PrefetchScalarGridSpec(
            num_scalar_prefetch=0,
            grid=grid,
            in_specs=[
                pl.BlockSpec((tm, tk), lambda i, k: (i, k)),   # A tile
                e_spec,                                        # augmented E
            ],
            out_specs=pl.BlockSpec((tm, D), lambda i, k: (i, 0)),
            scratch_shapes=[
                pltpu.VMEM((tm, d_aug), jnp.float32),          # f32 accumulator
            ],
        ),
        compiler_params=pltpu.CompilerParams(
            dimension_semantics=("parallel", "arbitrary"),
            vmem_limit_bytes=vmem_limit_bytes,
        ),
    )(a_c, e_c)


def bag2vec_reference(A, weights, emb):
    scaled = A * weights[None, :]
    r = scaled.sum(axis=1, keepdims=True)
    return (scaled / jnp.maximum(1e-15, r)) @ emb


if __name__ == "__main__":
    key = jax.random.PRNGKey(0)
    k_a, k_e, k_w, k_b = jax.random.split(key, 4)

    # --- case 1: aligned shapes, exact f32 path (tight tolerance) -----------
    # vocab_size V = 256, dim D = 128, number of bags (rows of A) N = 8.
    N, V, D = 8, 256, 128
    counts = jax.random.randint(k_a, (N, V), 1, 4).astype(jnp.float32)
    A = jax.random.bernoulli(k_a, p=0.1, shape=(N, V)).astype(jnp.float32) * counts
    emb_i = jax.random.normal(k_e, (V, D), dtype=jnp.float32) * 0.1
    weights = jnp.ones((V,), dtype=jnp.float32)   # module default: np.ones(vocab)
    # TODO(synk): forward_o / ovectors path is the same kernel applied to a
    # second embedding table; only the forward()/ivectors path is exercised.

    out = jax.block_until_ready(
        bag2vec_forward(A, weights, emb_i, compute_dtype=jnp.float32))
    ref = bag2vec_reference(A, weights, emb_i)
    assert out.shape == (N, D)
    assert jnp.allclose(out, ref, atol=1e-4, rtol=1e-4), "f32 path mismatch"

    # --- case 2: ragged N/V, exact f32 path (exercises the tail mask) -------
    N2, V2 = 13, 300
    A2 = jax.random.bernoulli(k_b, p=0.1, shape=(N2, V2)).astype(jnp.float32) * 2.0
    emb2 = jax.random.normal(k_e, (V2, D), dtype=jnp.float32) * 0.1
    w2 = jnp.abs(jax.random.normal(k_w, (V2,), dtype=jnp.float32)) + 0.5
    out2 = jax.block_until_ready(
        bag2vec_forward(A2, w2, emb2, compute_dtype=jnp.float32))
    ref2 = bag2vec_reference(A2, w2, emb2)
    assert out2.shape == (N2, D)
    assert jnp.allclose(out2, ref2, atol=1e-4, rtol=1e-4), "ragged f32 mismatch"

    # --- case 3: default bf16 fast path (relaxed tolerance) -----------------
    out3 = jax.block_until_ready(bag2vec_forward(A2, w2, emb2))
    assert out3.shape == (N2, D)
    assert jnp.allclose(out3, ref2, atol=5e-3, rtol=5e-2), "bf16 path mismatch"

    print("KERNEL_OK")
</pallas_src>

<mosaic_0001>
module attributes {stable_mosaic.version = 11 : i64} {
  func.func @bag2vec_kernel(%arg0: i32, %arg1: i32, %arg2: memref<8x256xf32, #tpu.memory_space<vmem>>, %arg3: memref<256x129xf32, #tpu.memory_space<vmem>>, %arg4: memref<8x128xf32, #tpu.memory_space<vmem>>, %arg5: memref<8x129xf32, #tpu.memory_space<vmem>>) attributes {dimension_semantics = [#tpu.dimension_semantics<parallel>, #tpu.dimension_semantics<arbitrary>], iteration_bounds = array<i64: 1, 1>, scalar_prefetch = 0 : i64, scratch_operands = 1 : i64, tpu.core_type = #tpu.core_type<tc>, window_params = [{transform_indices = @transform_0, window_bounds = array<i64: 8, 256>}, {pipeline_mode = #tpu.pipeline_mode<synchronous>, transform_indices = @transform_1, window_bounds = array<i64: 256, 129>}, {transform_indices = @transform_2, window_bounds = array<i64: 8, 128>}]} {
    %c0_i32 = arith.constant 0 : i32
    %0 = arith.cmpi eq, %arg1, %c0_i32 : i32
    %1 = arith.extui %0 : i1 to i32
    %c0_i32_0 = arith.constant 0 : i32
    %2 = arith.cmpi ne, %1, %c0_i32_0 : i32
    scf.if %2 {
      %cst_9 = arith.constant 0.000000e+00 : f32
      %15 = vector.broadcast %cst_9 : f32 to vector<8x129xf32>
      %c0_10 = arith.constant 0 : index
      %c0_11 = arith.constant 0 : index
      %16 = vector.load %arg5[%c0_10, %c0_11] : memref<8x129xf32, #tpu.memory_space<vmem>>, vector<8x129xf32>
      tpu.vector_store %arg5[%c0_10, %c0_11], %15 {strides = array<i32>} : memref<8x129xf32, #tpu.memory_space<vmem>>, vector<8x129xf32>,
    } else {
    }
    %c0 = arith.constant 0 : index
    %c0_1 = arith.constant 0 : index
    %3 = vector.load %arg2[%c0, %c0_1] : memref<8x256xf32, #tpu.memory_space<vmem>>, vector<8x256xf32>
    %c256_i32 = arith.constant 256 : i32
    %4 = arith.muli %arg1, %c256_i32 : i32
    %5 = tpu.assume_multiple %4, 256 : i32
    %6 = arith.index_cast %5 : i32 to index
    %c0_2 = arith.constant 0 : index
    %7 = vector.load %arg3[%6, %c0_2] : memref<256x129xf32, #tpu.memory_space<vmem>>, vector<256x129xf32>
    %c0_3 = arith.constant 0 : index
    %c0_4 = arith.constant 0 : index
    %8 = vector.load %arg5[%c0_3, %c0_4] : memref<8x129xf32, #tpu.memory_space<vmem>>, vector<8x129xf32>
    %cst = arith.constant dense<0.000000e+00> : vector<8x129xf32>
    %9 = tpu.matmul %3, %7, %cst {dimension_numbers = #tpu.dot_dimension_numbers<[1], [0], [0], [1], [0, 0, 1, 1], [], []>} : vector<8x256xf32>, vector<256x129xf32>, vector<8x129xf32> -> vector<8x129xf32>
    %10 = arith.addf %8, %9 : vector<8x129xf32>
    %c0_5 = arith.constant 0 : index
    %c0_6 = arith.constant 0 : index
    %11 = vector.load %arg5[%c0_5, %c0_6] : memref<8x129xf32, #tpu.memory_space<vmem>>, vector<8x129xf32>
    tpu.vector_store %arg5[%c0_5, %c0_6], %10 {strides = array<i32>} : memref<8x129xf32, #tpu.memory_space<vmem>>, vector<8x129xf32>,
    %c0_i32_7 = arith.constant 0 : i32
    %12 = arith.cmpi eq, %arg1, %c0_i32_7 : i32
    %13 = arith.extui %12 : i1 to i32
    %c0_i32_8 = arith.constant 0 : i32
    %14 = arith.cmpi ne, %13, %c0_i32_8 : i32
    scf.if %14 {
      %c0_9 = arith.constant 0 : index
      %c0_10 = arith.constant 0 : index
      %15 = vector.load %arg5[%c0_9, %c0_10] : memref<8x129xf32, #tpu.memory_space<vmem>>, vector<8x129xf32>
      %16 = vector.extract_strided_slice %15 {offsets = [0, 128], sizes = [8, 1], strides = [1, 1]} : vector<8x129xf32> to vector<8x1xf32>
      %cst_11 = arith.constant 1.000000e-15 : f32
      %17 = vector.broadcast %cst_11 : f32 to vector<8x1xf32>
      %18 = arith.maximumf %17, %16 : vector<8x1xf32>
      %19 = tpu.reciprocal %18 : vector<8x1xf32> -> vector<8x1xf32>
      %20 = vector.extract_strided_slice %15 {offsets = [0, 0], sizes = [8, 128], strides = [1, 1]} : vector<8x129xf32> to vector<8x128xf32>
      %21 = vector.broadcast %19 : vector<8x1xf32> to vector<8x128xf32>
      %22 = arith.mulf %20, %21 : vector<8x128xf32>
      %c0_12 = arith.constant 0 : index
      %c0_13 = arith.constant 0 : index
      %23 = vector.load %arg4[%c0_12, %c0_13] : memref<8x128xf32, #tpu.memory_space<vmem>>, vector<8x128xf32>
      tpu.vector_store %arg4[%c0_12, %c0_13], %22 {strides = array<i32>} : memref<8x128xf32, #tpu.memory_space<vmem>>, vector<8x128xf32>,
    } else {
    }
    return
  }
  func.func @transform_0(%arg0: i32, %arg1: i32) -> (i32, i32) {
    %c0_i32 = arith.constant 0 : i32
    return %arg0, %arg1 : i32, i32
  }
  func.func @transform_1(%arg0: i32, %arg1: i32) -> (i32, i32) {
    %c0_i32 = arith.constant 0 : i32
    %c0_i32_0 = arith.constant 0 : i32
    %c0_i32_1 = arith.constant 0 : i32
    return %c0_i32, %c0_i32_0 : i32, i32
  }
  func.func @transform_2(%arg0: i32, %arg1: i32) -> (i32, i32) {
    %c0_i32 = arith.constant 0 : i32
    %c0_i32_0 = arith.constant 0 : i32
    return %arg0, %c0_i32 : i32, i32
  }
}

</mosaic_0001>

<llo_original>
// kernel: tpu_custom_call.1
$region0: #{tpu_custom_call.1}
  #allocation0 [shape = 'u32[]', space=smem, size = 0x4, offset = 0x4, fixed_abs, tag = 'smem constant byte address 0x4 - core index']
  #allocation1 [shape = 'u32[144,128]{1,0:T(1,128)}', space=vmem, size = 0x12000, scoped, tag = 'internal scratch']
  #allocation2 [shape = 'f32[8,129]{1,0:T(8,128)}', space=vmem, size = 0x2000, scoped, tag = 'scratch operand']
  %s0 = inlined_call_operand.vmem [shape: f32[8,256], index: 0, kind: input, shape index: {}]
  %s1 = inlined_call_operand.vmem [shape: f32[256,129], index: 1, kind: input, shape index: {}]
  %s2 = inlined_call_operand.hbm [shape: f32[8,128], index: 2, kind: output, shape index: {}]
  %s3 = sld [smem:[#allocation0]]
  $region26: #{tpu_custom_call.1} parent=0
    _
  %s5 = ssub.s32 1, %s3
  %s6 = scalar_select 0, %s5, %s3
  $region1: #{tpu_custom_call.1} parent=0
    #allocation3 [shape = 'u8[4096]{0}', space=vmem, size = 0x1000, scoped, tag = 'output window, operand 0, single buffered']
    #allocation4 [shape = 's32[1]{0}', space=sflag, size = 0x4, scoped, tag = 'scoped memory for tpu_custom_call.1']
    %7 = vsyncpa [#allocation4], 0
    // Predicated region
    $region2: #{tpu_custom_call.1} parent=1 // pred_check
      _
    $region3: #{tpu_custom_call.1} parent=1 // pred_check_branch
      %9 = sbr.rel (0) target = $region5
    $region4: #{tpu_custom_call.1} parent=1 // pred_region
      _
    $region5: #{tpu_custom_call.1} parent=1 // pred_fallthru
      _
    // Predicated region
    $region6: #{tpu_custom_call.1} parent=1 // pred_check
      _
    $region7: #{tpu_custom_call.1} parent=1 // pred_check_branch
      %11 = sbr.rel (0) target = $region9
    $region8: #{tpu_custom_call.1} parent=1 // pred_region
      _
    $region9: #{tpu_custom_call.1} parent=1 // pred_fallthru
      _
    %p12 = scmp.eq.s32.totalorder 0, 0
    // Predicated region
    $region10: #{tpu_custom_call.1} parent=1 // pred_check
      %p13 = pneg %p12
    $region11: #{tpu_custom_call.1} parent=1 // pred_check_branch
      %15 = sbr.rel (%p13) target = $region13
    $region12: #{tpu_custom_call.1} parent=1 // pred_region
      %16 = vst [vmem:[#allocation2] sm:$0xff] 0.0
      %vm17 = vcmask 7168
      %18 = vst.msk [vmem:[#allocation2 + $0x8] sm:$0xff] %vm17, 0.0
    $region13: #{tpu_custom_call.1} parent=1 // pred_fallthru
      _
    %v19 = vld [vmem:[%s0] sm:$0xff]
    %v20 = vld [vmem:[%s0 + $0x8] sm:$0xff]
    %s21 = smul.u32 0, 256
    %s22 = sshra.s32 %s21, 3
    %s23 = sand.u32 %s21, 7
    %s24 = smul.u32 %s22, 2
    %s25 = smul.addr %s24, 8
    %s26 = scalar_lea.vmem %s1, %s25
    %v27 = vld [vmem:[%s26] sm:$0xff]
    %v28 = vld [vmem:[%s26 + $0x8] sm:$0xff]
    %v29 = vld [vmem:[%s26 + $0x10] sm:$0xff]
    %v30 = vld [vmem:[%s26 + $0x18] sm:$0xff]
    %v31 = vld [vmem:[%s26 + $0x20] sm:$0xff]
    %v32 = vld [vmem:[%s26 + $0x28] sm:$0xff]
    %v33 = vld [vmem:[%s26 + $0x30] sm:$0xff]
    %v34 = vld [vmem:[%s26 + $0x38] sm:$0xff]
    %v35 = vld [vmem:[%s26 + $0x40] sm:$0xff]
    %v36 = vld [vmem:[%s26 + $0x48] sm:$0xff]
    %v37 = vld [vmem:[%s26 + $0x50] sm:$0xff]
    %v38 = vld [vmem:[%s26 + $0x58] sm:$0xff]
    %v39 = vld [vmem:[%s26 + $0x60] sm:$0xff]
    %v40 = vld [vmem:[%s26 + $0x68] sm:$0xff]
    %v41 = vld [vmem:[%s26 + $0x70] sm:$0xff]
    %v42 = vld [vmem:[%s26 + $0x78] sm:$0xff]
    %v43 = vld [vmem:[%s26 + $0x80] sm:$0xff]
    %v44 = vld [vmem:[%s26 + $0x88] sm:$0xff]
    %v45 = vld [vmem:[%s26 + $0x90] sm:$0xff]
    %v46 = vld [vmem:[%s26 + $0x98] sm:$0xff]
    %v47 = vld [vmem:[%s26 + $0xa0] sm:$0xff]
    %v48 = vld [vmem:[%s26 + $0xa8] sm:$0xff]
    %v49 = vld [vmem:[%s26 + $0xb0] sm:$0xff]
    %v50 = vld [vmem:[%s26 + $0xb8] sm:$0xff]
    %v51 = vld [vmem:[%s26 + $0xc0] sm:$0xff]
    %v52 = vld [vmem:[%s26 + $0xc8] sm:$0xff]
    %v53 = vld [vmem:[%s26 + $0xd0] sm:$0xff]
    %v54 = vld [vmem:[%s26 + $0xd8] sm:$0xff]
    %v55 = vld [vmem:[%s26 + $0xe0] sm:$0xff]
    %v56 = vld [vmem:[%s26 + $0xe8] sm:$0xff]
    %v57 = vld [vmem:[%s26 + $0xf0] sm:$0xff]
    %v58 = vld [vmem:[%s26 + $0xf8] sm:$0xff]
    %v59 = vld [vmem:[%s26 + $0x100] sm:$0xff]
    %v60 = vld [vmem:[%s26 + $0x108] sm:$0xff]
    %v61 = vld [vmem:[%s26 + $0x110] sm:$0xff]
    %v62 = vld [vmem:[%s26 + $0x118] sm:$0xff]
    %v63 = vld [vmem:[%s26 + $0x120] sm:$0xff]
    %v64 = vld [vmem:[%s26 + $0x128] sm:$0xff]
    %v65 = vld [vmem:[%s26 + $0x130] sm:$0xff]
    %v66 = vld [vmem:[%s26 + $0x138] sm:$0xff]
    %v67 = vld [vmem:[%s26 + $0x140] sm:$0xff]
    %v68 = vld [vmem:[%s26 + $0x148] sm:$0xff]
    %v69 = vld [vmem:[%s26 + $0x150] sm:$0xff]
    %v70 = vld [vmem:[%s26 + $0x158] sm:$0xff]
    %v71 = vld [vmem:[%s26 + $0x160] sm:$0xff]
    %v72 = vld [vmem:[%s26 + $0x168] sm:$0xff]
    %v73 = vld [vmem:[%s26 + $0x170] sm:$0xff]
    %v74 = vld [vmem:[%s26 + $0x178] sm:$0xff]
    %v75 = vld [vmem:[%s26 + $0x180] sm:$0xff]
    %v76 = vld [vmem:[%s26 + $0x188] sm:$0xff]
    %v77 = vld [vmem:[%s26 + $0x190] sm:$0xff]
    %v78 = vld [vmem:[%s26 + $0x198] sm:$0xff]
    %v79 = vld [vmem:[%s26 + $0x1a0] sm:$0xff]
    %v80 = vld [vmem:[%s26 + $0x1a8] sm:$0xff]
    %v81 = vld [vmem:[%s26 + $0x1b0] sm:$0xff]
    %v82 = vld [vmem:[%s26 + $0x1b8] sm:$0xff]
    %v83 = vld [vmem:[%s26 + $0x1c0] sm:$0xff]
    %v84 = vld [vmem:[%s26 + $0x1c8] sm:$0xff]
    %v85 = vld [vmem:[%s26 + $0x1d0] sm:$0xff]
    %v86 = vld [vmem:[%s26 + $0x1d8] sm:$0xff]
    %v87 = vld [vmem:[%s26 + $0x1e0] sm:$0xff]
    %v88 = vld [vmem:[%s26 + $0x1e8] sm:$0xff]
    %v89 = vld [vmem:[%s26 + $0x1f0] sm:$0xff]
    %v90 = vld [vmem:[%s26 + $0x1f8] sm:$0xff]
    %v91 = vld [vmem:[#allocation2] sm:$0xff]
    %v92 = vld [vmem:[#allocation2 + $0x8] sm:$0xff]
    %93 = vmatprep.subr.mxu0 %v28
    %94 = vmatpush1.msra.mxu0 %v27
    %95 = vmatprep.subr.mxu0 %v30
    %96 = vmatpush1.msra.mxu0 %v29
    %97 = vmatprep.subr.mxu0 %v32
    %98 = vmatpush1.msra.mxu0 %v31
    %99 = vmatprep.subr.mxu0 %v34
    %100 = vmatpush1.msra.mxu0 %v33
    %101 = vmatprep.subr.mxu0 %v36
    %102 = vmatpush1.msra.mxu0 %v35
    %103 = vmatprep.subr.mxu0 %v38
    %104 = vmatpush1.msra.mxu0 %v37
    %105 = vmatprep.subr.mxu0 %v40
    %106 = vmatpush1.msra.mxu0 %v39
    %107 = vmatprep.subr.mxu0 %v42
    %108 = vmatpush1.msra.mxu0 %v41
    %109 = vmatprep.subr.mxu0 %v44
    %110 = vmatpush1.msra.mxu0 %v43
    %111 = vmatprep.subr.mxu0 %v46
    %112 = vmatpush1.msra.mxu0 %v45
    %113 = vmatprep.subr.mxu0 %v48
    %114 = vmatpush1.msra.mxu0 %v47
    %115 = vmatprep.subr.mxu0 %v50
    %116 = vmatpush1.msra.mxu0 %v49
    %117 = vmatprep.subr.mxu0 %v52
    %118 = vmatpush1.msra.mxu0 %v51
    %119 = vmatprep.subr.mxu0 %v54
    %120 = vmatpush1.msra.mxu0 %v53
    %121 = vmatprep.subr.mxu0 %v56
    %122 = vmatpush1.msra.mxu0 %v55
    %123 = vmatprep.subr.mxu0 %v58
    %124 = vmatpush1.msra.mxu0 %v57
    %125 = vmatprep.subr.mxu0 %v60
    %126 = vmatpush1.msra.mxu0 %v59
    %127 = vmatprep.subr.mxu0 %v62
    %128 = vmatpush1.msra.mxu0 %v61
    %129 = vmatprep.subr.mxu0 %v64
    %130 = vmatpush1.msra.mxu0 %v63
    %131 = vmatprep.subr.mxu0 %v66
    %132 = vmatpush1.msra.mxu0 %v65
    %133 = vmatprep.subr.mxu0 %v68
    %134 = vmatpush1.msra.mxu0 %v67
    %135 = vmatprep.subr.mxu0 %v70
    %136 = vmatpush1.msra.mxu0 %v69
    %137 = vmatprep.subr.mxu0 %v72
    %138 = vmatpush1.msra.mxu0 %v71
    %139 = vmatprep.subr.mxu0 %v74
    %140 = vmatpush1.msra.mxu0 %v73
    %141 = vmatprep.subr.mxu0 %v76
    %142 = vmatpush1.msra.mxu0 %v75
    %143 = vmatprep.subr.mxu0 %v78
    %144 = vmatpush1.msra.mxu0 %v77
    %145 = vmatprep.subr.mxu0 %v80
    %146 = vmatpush1.msra.mxu0 %v79
    %147 = vmatprep.subr.mxu0 %v82
    %148 = vmatpush1.msra.mxu0 %v81
    %149 = vmatprep.subr.mxu0 %v84
    %150 = vmatpush1.msra.mxu0 %v83
    %151 = vmatprep.subr.mxu0 %v86
    %152 = vmatpush1.msra.mxu0 %v85
    %153 = vmatprep.subr.mxu0 %v88
    %154 = vmatpush1.msra.mxu0 %v87
    %155 = vmatprep.subr.mxu0 %v90
    %156 = vmatpush1.msra.mxu0 %v89
    %157 = vmatprep.mubr.f32.mxu0 %v20
    %158 = vmatmul.mubr.f32.gmra.mrb[0].mxu0 %v19
    %v159 = vpop.f32.mrb[0].mxu0
    %v160 = vadd.f32 0.0, %v159
    %v161 = vpop.f32.mrb[0].mxu0
    %v162 = vadd.f32 0.0, %v161
    %163 = vdwg.mxu0
    %v164 = vadd.f32 %v91, %v160
    %v165 = vadd.f32 %v92, %v162
    %166 = vst [vmem:[#allocation2] sm:$0xff] %v164
    %vm167 = vcmask 7168
    %168 = vst.msk [vmem:[#allocation2 + $0x8] sm:$0xff] %vm167, %v165
    // Predicated region
    $region14: #{tpu_custom_call.1} parent=1 // pred_check
      %p169 = pneg %p12
    $region15: #{tpu_custom_call.1} parent=1 // pred_check_branch
      %171 = sbr.rel (%p169) target = $region17
    $region16: #{tpu_custom_call.1} parent=1 // pred_region
      %v172 = vld [vmem:[#allocation2] sm:$0xff]
      %v173 = vld [vmem:[#allocation2 + $0x8] sm:$0xff]
      %v174 = vmax.f32 %v173, 1e-15
      %v175 = vrcp.pop %v174
      %177 = vset.pattern.permute.xlu0 0
      %178 = vperm.xlu0 %177, %v175
      %v179 = vpop.permute.xlu0 %178
      %v181 = vmul.f32 %v172, %v179
      %182 = vst [vmem:[#allocation3] sm:$0xff] %v181
    $region17: #{tpu_custom_call.1} parent=1 // pred_fallthru
      _
    // Predicated region
    $region18: #{tpu_custom_call.1} parent=1 // pred_check
      _
    $region19: #{tpu_custom_call.1} parent=1 // pred_check_branch
      %184 = sbr.rel (0) target = $region21
    $region20: #{tpu_custom_call.1} parent=1 // pred_region
      %s186 = ssub.s32 128, 128
      %187 = vsyncadd [#allocation4], %s186
      %s189 = sshll.u32 [#allocation3], 4
      %s190 = int_to_ptr.vmem [resolvable:$true] %s189
      %192 = dma.vmem_to_hbm [thread:$0]  %s190, 128, %s2, [#allocation4]
    $region21: #{tpu_custom_call.1} parent=1 // pred_fallthru
      _
    // Predicated region
    $region22: #{tpu_custom_call.1} parent=1 // pred_check
      _
    $region23: #{tpu_custom_call.1} parent=1 // pred_check_branch
      %194 = sbr.rel (0) target = $region25
    $region24: #{tpu_custom_call.1} parent=1 // pred_region
      %195 = dma.done [#allocation4], 128
    $region25: #{tpu_custom_call.1} parent=1 // pred_fallthru
      _
    %196 = vsyncpa [#allocation4], 1

</llo_original>
